<compile_context>
chip_gen: v5e
topology: v5e:2x2
jax: 0.10.0
libtpu: 0.0.40
codegen_flags: <defaults>
</compile_context>

<pallas_src>
import numpy as np
import jax
import jax.numpy as jnp
from jax.experimental import pallas as pl
from jax.experimental.pallas import tpu as pltpu

EPS = 1e-5


def _round_up(a, b):
    return (a + b - 1) // b * b


def _cdiv(a, b):
    return (a + b - 1) // b


# ---------------------------------------------------------------------------
# Pallas kernels
# ---------------------------------------------------------------------------
def _deconv_stats_kernel(gT_ref, wT_ref, yT_ref, sum_ref, sq_ref):
    """Pass 1: yT = wT @ gT (single deep MXU matmul, f32 accum) + per-tile BN stats.

    gT_ref : [KCp, TN] bf16   (im2col slab, N on lanes, (c,k)-major contraction)
    wT_ref : [Cp,  KCp] bf16  (folded transposed-conv weights)
    yT_ref : [Cp,  TN]  bf16  (pre-BN conv output, lane-dense)
    sum_ref, sq_ref : [Cp, 1] f32 per-tile partial sums for BatchNorm (from f32 acc).
    """
    acc = jnp.dot(wT_ref[...], gT_ref[...], preferred_element_type=jnp.float32)
    yT_ref[...] = acc.astype(yT_ref.dtype)
    sum_ref[...] = jnp.sum(acc, axis=1, keepdims=True)
    sq_ref[...] = jnp.sum(acc * acc, axis=1, keepdims=True)


def _bn_relu_kernel(yT_ref, sb_ref, oT_ref):
    """Pass 2: o = ReLU(y * s + b), in place over the yT buffer (aliased output)."""
    y = yT_ref[...].astype(jnp.float32)
    sb = sb_ref[...]                       # (2, Cp, 128) lane-dense broadcast
    s = sb[0, :, 0:1]                      # (Cp, 1)
    b = sb[1, :, 0:1]
    oT_ref[...] = jnp.maximum(y * s + b, 0.0).astype(oT_ref.dtype)


# ---------------------------------------------------------------------------
# Host-side rulebook (kernel map) for a dense voxel grid
# ---------------------------------------------------------------------------
def build_transposed_kernel_map(grid_size, kernel_size=3, dilation=1):
    """Neighbor index table [K, N] for a transposed sparse conv on a dense grid.

    Invalid (out-of-range / unoccupied) neighbors are remapped to index N (a zero
    column appended to the feature table), so no validity-mask multiply is needed.
    """
    offs = np.arange(kernel_size) - (kernel_size // 2)
    g = grid_size
    coords = np.stack(
        np.meshgrid(np.arange(g), np.arange(g), np.arange(g), indexing="ij"), -1
    ).reshape(-1, 3)
    n = coords.shape[0]
    idx = []
    for dx in offs:
        for dy in offs:
            for dz in offs:
                # transposed conv (stride=1): output p gathers input at p - offset_k
                nc = coords - np.array([dx, dy, dz]) * dilation
                ok = np.all((nc >= 0) & (nc < g), axis=1)
                flat = nc[:, 0] * g * g + nc[:, 1] * g + nc[:, 2]
                idx.append(np.where(ok, flat, n))  # n -> appended zero column
    return jnp.asarray(np.stack(idx), jnp.int32)


# ---------------------------------------------------------------------------
# Tiling / VMEM budgeting
# ---------------------------------------------------------------------------
def _pass1_vmem_bytes(KCp, Cp, tile_n, gt_buffers=2):
    gT = gt_buffers * KCp * tile_n * 2        # bf16 im2col tiles (multi-buffered)
    wT = 2 * Cp * KCp * 2                     # bf16 folded weights
    yT = 2 * Cp * tile_n * 2                  # bf16 conv-output tiles
    stats = 2 * 2 * Cp * 128 * 4              # tiny partial-stat blocks (lane-padded)
    return gT + wT + yT + stats


def _choose_tile_n(N, KCp, Cp, tile_n_req, vmem_budget, gt_buffers):
    n_pad = _round_up(max(N, 1), 128)
    t = max(128, min(_round_up(tile_n_req, 128), n_pad))
    while t > 128 and _pass1_vmem_bytes(KCp, Cp, t, gt_buffers) > vmem_budget:
        t -= 128
    nt = _cdiv(N, t)
    if nt > 1 and nt % 2 == 1:                # prefer even tile count (v7x megacore)
        t2 = max(128, _round_up(_cdiv(N, nt + 1), 128))
        if _cdiv(N, t2) % 2 == 0:
            t = t2
    return t


# ---------------------------------------------------------------------------
# BasicDeconvolutionBlock forward
# ---------------------------------------------------------------------------
def basic_deconv_block_forward(
    x, w, gamma, beta, nbr_idx,
    tile_n=512,
    vmem_budget_bytes=28 * 1024 * 1024,   # conservative: fits v7x's smaller VMEM
    gt_buffers=2,                         # set 3 on v5e if gT DMA is exposed
    channel_major_out=True,               # fast path: return [Cout, N] (lane-dense)
):
    """x:[N,Cin] f32, w:[K,Cin,Cout] f32, gamma/beta:[Cout] f32, nbr_idx:[K,N] i32."""
    N, Cin = x.shape
    K, _, Cout = w.shape
    KC = K * Cin
    KCp = _round_up(KC, 16)        # bf16 sublane packing = 16 rows / vreg
    Cp = _round_up(Cout, 16)

    tile_n = _choose_tile_n(N, KCp, Cp, tile_n, vmem_budget_bytes, gt_buffers)
    nt = _cdiv(N, tile_n)
    Np = nt * tile_n

    # ---- rulebook gather, channel-major so the [KC, N] slab needs NO transpose pass.
    # result[c, k, n] = x_pad[idx[k, n], c]; reshape is a contiguous (c,k)-major view.
    xT_pad = jnp.concatenate(
        [x.T, jnp.zeros((Cin, 1), x.dtype)], axis=1
    ).astype(jnp.bfloat16)                                        # [Cin, N+1] bf16
    gT = jnp.take(xT_pad, nbr_idx, axis=1).reshape(KC, N)         # [Cin*K, N]
    gT = jnp.pad(gT, ((0, KCp - KC), (0, Np - N)))                # [KCp, Np] bf16

    # fold / reorder the (tiny) weights to the same (c,k)-major contraction order
    w_ck = jnp.transpose(w, (1, 0, 2)).reshape(KC, Cout)          # [Cin*K, Cout]
    wT = jnp.pad(w_ck, ((0, KCp - KC), (0, Cp - Cout))).T.astype(jnp.bfloat16)

    est = _pass1_vmem_bytes(KCp, Cp, tile_n, gt_buffers)
    vmem_limit = int(min(max(1.5 * est, 16 * 1024 * 1024), 64 * 1024 * 1024))
    cparams = pltpu.CompilerParams(
        dimension_semantics=("parallel",),     # shard N-tiles across TCs (v7x)
        vmem_limit_bytes=vmem_limit,
    )

    gt_spec_kwargs = {}
    if gt_buffers > 2:
        gt_spec_kwargs["pipeline_mode"] = pl.Buffered(gt_buffers)

    # ---- pass 1: conv (single deep matmul) + per-tile BN partial sums (f32 acc)
    yT, sums, sqs = pl.pallas_call(
        _deconv_stats_kernel,
        out_shape=(
            jax.ShapeDtypeStruct((Cp, Np), jnp.bfloat16),
            jax.ShapeDtypeStruct((nt, Cp, 1), jnp.float32),
            jax.ShapeDtypeStruct((nt, Cp, 1), jnp.float32),
        ),
        grid=(nt,),
        in_specs=[
            pl.BlockSpec((KCp, tile_n), lambda i: (0, i), **gt_spec_kwargs),
            pl.BlockSpec((Cp, KCp), lambda i: (0, 0)),
        ],
        out_specs=(
            pl.BlockSpec((Cp, tile_n), lambda i: (0, i)),
            pl.BlockSpec((None, Cp, 1), lambda i: (i, 0, 0)),
            pl.BlockSpec((None, Cp, 1), lambda i: (i, 0, 0)),
        ),
        compiler_params=cparams,
    )(gT, wT)

    # ---- tiny cross-tile reduction + fused BN coefficients (global batch stats).
    # Padded rows/columns contribute exactly 0 to both sums; dividing by the true N
    # keeps the statistics exact.
    total = jnp.sum(sums, axis=0)                        # [Cp, 1]
    total_sq = jnp.sum(sqs, axis=0)                      # [Cp, 1]
    mean = total / N
    var = jnp.maximum(total_sq / N - mean * mean, 0.0)   # biased variance
    gamma_p = jnp.pad(gamma.reshape(Cout, 1), ((0, Cp - Cout), (0, 0)))
    beta_p = jnp.pad(beta.reshape(Cout, 1), ((0, Cp - Cout), (0, 0)))
    s = gamma_p * jax.lax.rsqrt(var + EPS)
    b = beta_p - mean * s
    sb = jnp.broadcast_to(jnp.stack([s, b], axis=0), (2, Cp, 128)).astype(jnp.float32)

    # ---- pass 2: fused scale/shift + ReLU, written IN PLACE over the yT buffer
    oT = pl.pallas_call(
        _bn_relu_kernel,
        out_shape=jax.ShapeDtypeStruct((Cp, Np), jnp.bfloat16),
        grid=(nt,),
        in_specs=[
            pl.BlockSpec((Cp, tile_n), lambda i: (0, i)),
            pl.BlockSpec((2, Cp, 128), lambda i: (0, 0, 0)),
        ],
        out_specs=pl.BlockSpec((Cp, tile_n), lambda i: (0, i)),
        input_output_aliases={0: 0},
        compiler_params=cparams,
    )(yT, sb)

    out = oT[:Cout, :N]                                  # channel-major [Cout, N] bf16
    return out if channel_major_out else out.T           # optional [N, Cout] parity


# ---------------------------------------------------------------------------
# Pure-JAX reference mirroring the kernel's numerics (bf16 matmul inputs, f32 stats
# from the f32 conv output, bf16 intermediate, bf16 output)
# ---------------------------------------------------------------------------
def basic_deconv_block_ref(x, w, gamma, beta, nbr_idx):
    N, Cin = x.shape
    x_pad = jnp.concatenate([x, jnp.zeros((1, Cin), x.dtype)], axis=0)
    g = x_pad[nbr_idx]                                   # [K, N, Cin]
    y = jnp.einsum(
        "knc,kcd->nd",
        g.astype(jnp.bfloat16),
        w.astype(jnp.bfloat16),
        preferred_element_type=jnp.float32,
    )
    m = jnp.mean(y, axis=0, keepdims=True)
    v = jnp.mean((y - m) ** 2, axis=0, keepdims=True)
    s = gamma * jax.lax.rsqrt(v + EPS)
    b = beta - m * s
    y_q = y.astype(jnp.bfloat16).astype(jnp.float32)     # mirror bf16 yT intermediate
    return jax.nn.relu(y_q * s + b).astype(jnp.bfloat16)


# ---------------------------------------------------------------------------
if __name__ == "__main__":
    Cin, Cout, ksize, G = 4, 8, 3, 8
    K = ksize ** 3
    N = G ** 3                                           # 512 occupied voxels

    key = jax.random.PRNGKey(0)
    k0, k1, k2, k3 = jax.random.split(key, 4)
    x = jax.random.normal(k0, (N, Cin), jnp.float32)
    w = 0.1 * jax.random.normal(k1, (K, Cin, Cout), jnp.float32)
    gamma = 1.0 + 0.1 * jax.random.normal(k2, (Cout,), jnp.float32)
    beta = 0.1 * jax.random.normal(k3, (Cout,), jnp.float32)

    nbr_idx = build_transposed_kernel_map(G, ksize)

    # fast path: channel-major [Cout, N] output (no wrapper transpose)
    out_cn = basic_deconv_block_forward(x, w, gamma, beta, nbr_idx, tile_n=256)
    out_cn = jax.block_until_ready(out_cn)

    ref = basic_deconv_block_ref(x, w, gamma, beta, nbr_idx)
    out_nc = np.asarray(out_cn.T.astype(jnp.float32))
    ref_nc = np.asarray(ref.astype(jnp.float32))
    np.testing.assert_allclose(out_nc, ref_nc, atol=2e-2, rtol=2e-2)

    print("KERNEL_OK")
</pallas_src>

<mosaic_0001>
module attributes {stable_mosaic.version = 11 : i64} {
  func.func @_deconv_stats_kernel(%arg0: i32, %arg1: memref<112x256xbf16, #tpu.memory_space<vmem>>, %arg2: memref<16x112xbf16, #tpu.memory_space<vmem>>, %arg3: memref<16x256xbf16, #tpu.memory_space<vmem>>, %arg4: memref<1x16x1xf32, #tpu.memory_space<vmem>>, %arg5: memref<1x16x1xf32, #tpu.memory_space<vmem>>) attributes {dimension_semantics = [#tpu.dimension_semantics<parallel>], iteration_bounds = array<i64: 2>, scalar_prefetch = 0 : i64, scratch_operands = 0 : i64, tpu.core_type = #tpu.core_type<tc>, window_params = [{transform_indices = @transform_0, window_bounds = array<i64: 112, 256>}, {pipeline_mode = #tpu.pipeline_mode<synchronous>, transform_indices = @transform_1, window_bounds = array<i64: 16, 112>}, {transform_indices = @transform_2, window_bounds = array<i64: 16, 256>}, {transform_indices = @transform_3, window_bounds = array<i64: 1, 16, 1>}, {transform_indices = @transform_4, window_bounds = array<i64: 1, 16, 1>}]} {
    %c0 = arith.constant 0 : index
    %c0_0 = arith.constant 0 : index
    %0 = vector.load %arg2[%c0, %c0_0] : memref<16x112xbf16, #tpu.memory_space<vmem>>, vector<16x112xbf16>
    %c0_1 = arith.constant 0 : index
    %c0_2 = arith.constant 0 : index
    %1 = vector.load %arg1[%c0_1, %c0_2] : memref<112x256xbf16, #tpu.memory_space<vmem>>, vector<112x256xbf16>
    %cst = arith.constant dense<0.000000e+00> : vector<16x256xf32>
    %2 = tpu.matmul %0, %1, %cst {dimension_numbers = #tpu.dot_dimension_numbers<[1], [0], [0], [1], [0, 0, 1, 1], [], []>} : vector<16x112xbf16>, vector<112x256xbf16>, vector<16x256xf32> -> vector<16x256xf32>
    %3 = arith.truncf %2 : vector<16x256xf32> to vector<16x256xbf16>
    %c0_3 = arith.constant 0 : index
    %c0_4 = arith.constant 0 : index
    %4 = vector.load %arg3[%c0_3, %c0_4] : memref<16x256xbf16, #tpu.memory_space<vmem>>, vector<16x256xbf16>
    tpu.vector_store %arg3[%c0_3, %c0_4], %3 {strides = array<i32>} : memref<16x256xbf16, #tpu.memory_space<vmem>>, vector<16x256xbf16>,
    %cst_5 = arith.constant dense<0.000000e+00> : vector<16xf32>
    %5 = vector.multi_reduction <add>, %2, %cst_5 [1] : vector<16x256xf32> to vector<16xf32>
    %6 = vector.shape_cast %5 : vector<16xf32> to vector<16x1xf32>
    %c0_6 = arith.constant 0 : index
    %c0_7 = arith.constant 0 : index
    %c0_8 = arith.constant 0 : index
    %7 = vector.load %arg4[%c0_6, %c0_7, %c0_8] : memref<1x16x1xf32, #tpu.memory_space<vmem>>, vector<1x16x1xf32>
    %8 = vector.shape_cast %7 : vector<1x16x1xf32> to vector<16x1xf32>
    %9 = vector.shape_cast %6 : vector<16x1xf32> to vector<1x16x1xf32>
    tpu.vector_store %arg4[%c0_6, %c0_7, %c0_8], %9 {strides = array<i32>} : memref<1x16x1xf32, #tpu.memory_space<vmem>>, vector<1x16x1xf32>,
    %10 = arith.mulf %2, %2 : vector<16x256xf32>
    %cst_9 = arith.constant dense<0.000000e+00> : vector<16xf32>
    %11 = vector.multi_reduction <add>, %10, %cst_9 [1] : vector<16x256xf32> to vector<16xf32>
    %12 = vector.shape_cast %11 : vector<16xf32> to vector<16x1xf32>
    %c0_10 = arith.constant 0 : index
    %c0_11 = arith.constant 0 : index
    %c0_12 = arith.constant 0 : index
    %13 = vector.load %arg5[%c0_10, %c0_11, %c0_12] : memref<1x16x1xf32, #tpu.memory_space<vmem>>, vector<1x16x1xf32>
    %14 = vector.shape_cast %13 : vector<1x16x1xf32> to vector<16x1xf32>
    %15 = vector.shape_cast %12 : vector<16x1xf32> to vector<1x16x1xf32>
    tpu.vector_store %arg5[%c0_10, %c0_11, %c0_12], %15 {strides = array<i32>} : memref<1x16x1xf32, #tpu.memory_space<vmem>>, vector<1x16x1xf32>,
    return
  }
  func.func @transform_0(%arg0: i32) -> (i32, i32) {
    %c0_i32 = arith.constant 0 : i32
    %c0_i32_0 = arith.constant 0 : i32
    return %c0_i32, %arg0 : i32, i32
  }
  func.func @transform_1(%arg0: i32) -> (i32, i32) {
    %c0_i32 = arith.constant 0 : i32
    %c0_i32_0 = arith.constant 0 : i32
    %c0_i32_1 = arith.constant 0 : i32
    return %c0_i32, %c0_i32_0 : i32, i32
  }
  func.func @transform_2(%arg0: i32) -> (i32, i32) {
    %c0_i32 = arith.constant 0 : i32
    %c0_i32_0 = arith.constant 0 : i32
    return %c0_i32, %arg0 : i32, i32
  }
  func.func @transform_3(%arg0: i32) -> (i32, i32, i32) {
    %c0_i32 = arith.constant 0 : i32
    %c0_i32_0 = arith.constant 0 : i32
    %c0_i32_1 = arith.constant 0 : i32
    return %arg0, %c0_i32, %c0_i32_0 : i32, i32, i32
  }
  func.func @transform_4(%arg0: i32) -> (i32, i32, i32) {
    %c0_i32 = arith.constant 0 : i32
    %c0_i32_0 = arith.constant 0 : i32
    %c0_i32_1 = arith.constant 0 : i32
    return %arg0, %c0_i32, %c0_i32_0 : i32, i32, i32
  }
}

</mosaic_0001>

<llo_original>
// kernel: tpu_custom_call.1
$region0: #{tpu_custom_call.1}
  #allocation0 [shape = 'u32[]', space=smem, size = 0x4, offset = 0x4, fixed_abs, tag = 'smem constant byte address 0x4 - core index']
  #allocation1 [shape = 'u32[72,128]{1,0:T(1,128)}', space=vmem, size = 0x9000, scoped, tag = 'internal scratch']
  %s0 = inlined_call_operand.hbm [shape: bf16[112,512], index: 0, kind: input, shape index: {}]
  %s1 = inlined_call_operand.hbm [shape: bf16[16,112], index: 1, kind: input, shape index: {}]
  %s2 = inlined_call_operand.hbm [shape: bf16[16,512], index: 2, kind: output, shape index: {0}]
  %s3 = inlined_call_operand.vmem [shape: f32[2,16,1], index: 3, kind: output, shape index: {1}]
  %s4 = inlined_call_operand.vmem [shape: f32[2,16,1], index: 4, kind: output, shape index: {2}]
  %5 = xla_tuple %s2, %s3, %s4
  %s6 = sld [smem:[#allocation0]]
  $region65: #{tpu_custom_call.1} parent=0
    _
  %s8 = ssub.s32 1, %s6
  %s9 = scalar_select 0, %s8, %s6
  $region1: #{tpu_custom_call.1} parent=0
    #allocation2 [shape = 'u8[114688]{0}', space=vmem, size = 0x1c000, scoped, tag = 'input window, operand 0']
    #allocation3 [shape = 's32[2]{0}', space=sflag, size = 0x8, scoped, tag = 'scoped memory for tpu_custom_call.1']
    #allocation4 [shape = 's32[2]{0}', space=sflag, size = 0x8, scoped, tag = 'scoped memory for tpu_custom_call.1']
    #allocation5 [shape = 'u8[4096]{0}', space=vmem, size = 0x1000, scoped, tag = 'input window, operand 1, single buffered']
    #allocation6 [shape = 's32[1]{0}', space=sflag, size = 0x4, scoped, tag = 'scoped memory for tpu_custom_call.1']
    #allocation7 [shape = 'u8[16384]{0}', space=vmem, size = 0x4000, scoped, tag = 'output window, operand 0']
    %10 = vsyncpa [#allocation3], 0
    %s11 = scalar_lea.sflag [#allocation3], 1
    %12 = vsyncpa %s11, 0
    %13 = vsyncpa [#allocation6], 0
    %14 = vsyncpa [#allocation4], 0
    %s15 = scalar_lea.sflag [#allocation4], 1
    %16 = vsyncpa %s15, 0
    loop: start=0, step=1, limit=4
    $region2: #{tpu_custom_call.1} parent=1 // loop_pre_header
      _
    $region3: #{tpu_custom_call.1} parent=1 // loop_header
      %s18 = sphi 0, %s22
      %p19 = scmp.ge.s32.totalorder %s18, 4
      %s28 = sphi 0, %s30
      %s31 = sphi 0, %s28
      %s32 = sphi 0, %s31
      %s48 = sphi 0, %s32
      %s52 = sphi 0, %s52
      %s54 = sphi 0, %s52
      %s55 = sphi 0, %s54
      %s69 = sphi 0, %s55
      %s75 = sphi 0, %s77
      %s78 = sphi 0, %s75
      %s79 = sphi 0, %s78
      %s95 = sphi 0, %s79
      %s101 = sphi 0, %s103
      %s104 = sphi 0, %s101
      %s105 = sphi 0, %s104
      %s121 = sphi 0, %s105
      %s127 = sphi 0, %s129
      %s130 = sphi 0, %s127
      %s131 = sphi 0, %s130
      %s147 = sphi 0, %s131
    $region4: #{tpu_custom_call.1} parent=1 // loop_header_branch
      %21 = sbr.rel (%p19) target = $region8
    $region5: #{tpu_custom_call.1} parent=1 // loop_body
      %s23 = ssub.s32 %s18, 1
      %s24 = ssub.s32 %s18, 2
      %s25 = sadd.s32 %s18, 1
      %s26 = ssub.s32 %s18, %s25
      %p27 = scmp.eq.s32.totalorder %s26, 0
      %s29 = sadd.s32 %s28, 1
      %s30 = scalar_select %p27, %s28, %s29
      %p33 = pneg %p27
      %p34 = scmp.eq.s32.totalorder %s18, 1
      %p35 = por %p33, %p34
      %p36 = scmp.ne.s32.totalorder %s28, %s31
      %p37 = scmp.eq.s32.totalorder %s18, 0
      %p38 = por %p36, %p37
      %p39 = scmp.ne.s32.totalorder %s28, %s31
      %p40 = scmp.eq.s32.totalorder %s23, 1
      %p41 = por %p39, %p40
      %p42 = scmp.ne.s32.totalorder %s31, %s32
      %p43 = scmp.eq.s32.totalorder %s23, 0
      %p44 = por %p42, %p43
      %p45 = scmp.ne.s32.totalorder %s31, %s32
      %p46 = scmp.eq.s32.totalorder %s24, 1
      %p47 = por %p45, %p46
      %p49 = scmp.ne.s32.totalorder %s32, %s48
      %p50 = scmp.eq.s32.totalorder %s24, 0
      %p51 = por %p49, %p50
      %s53 = sadd.s32 %s52, 1
      %p56 = scmp.eq.s32.totalorder %s18, 1
      %p57 = scmp.ne.s32.totalorder %s52, %s54
      %p58 = scmp.eq.s32.totalorder %s18, 0
      %p59 = por %p57, %p58
      %p60 = scmp.ne.s32.totalorder %s52, %s54
      %p61 = scmp.eq.s32.totalorder %s23, 1
      %p62 = por %p60, %p61
      %p63 = scmp.ne.s32.totalorder %s54, %s55
      %p64 = scmp.eq.s32.totalorder %s23, 0
      %p65 = por %p63, %p64
      %p66 = scmp.ne.s32.totalorder %s54, %s55
      %p67 = scmp.eq.s32.totalorder %s24, 1
      %p68 = por %p66, %p67
      %p70 = scmp.ne.s32.totalorder %s55, %s69
      %p71 = scmp.eq.s32.totalorder %s24, 0
      %p72 = por %p70, %p71
      %s73 = ssub.s32 %s18, %s25
      %p74 = scmp.eq.s32.totalorder %s73, 0
      %s76 = sadd.s32 %s75, 1
      %s77 = scalar_select %p74, %s75, %s76
      %p80 = pneg %p74
      %p81 = scmp.eq.s32.totalorder %s18, 1
      %p82 = por %p80, %p81
      %p83 = scmp.ne.s32.totalorder %s75, %s78
      %p84 = scmp.eq.s32.totalorder %s18, 0
      %p85 = por %p83, %p84
      %p86 = scmp.ne.s32.totalorder %s75, %s78
      %p87 = scmp.eq.s32.totalorder %s23, 1
      %p88 = por %p86, %p87
      %p89 = scmp.ne.s32.totalorder %s78, %s79
      %p90 = scmp.eq.s32.totalorder %s23, 0
      %p91 = por %p89, %p90
      %p92 = scmp.ne.s32.totalorder %s78, %s79
      %p93 = scmp.eq.s32.totalorder %s24, 1
      %p94 = por %p92, %p93
      %p96 = scmp.ne.s32.totalorder %s79, %s95
      %p97 = scmp.eq.s32.totalorder %s24, 0
      %p98 = por %p96, %p97
      %s99 = ssub.s32 %s18, %s25
      %p100 = scmp.eq.s32.totalorder %s99, 0
      %s102 = sadd.s32 %s101, 1
      %s103 = scalar_select %p100, %s101, %s102
      %p106 = pneg %p100
      %p107 = scmp.eq.s32.totalorder %s18, 1
      %p108 = por %p106, %p107
      %p109 = scmp.ne.s32.totalorder %s101, %s104
      %p110 = scmp.eq.s32.totalorder %s18, 0
      %p111 = por %p109, %p110
      %p112 = scmp.ne.s32.totalorder %s101, %s104
      %p113 = scmp.eq.s32.totalorder %s23, 1
      %p114 = por %p112, %p113
      %p115 = scmp.ne.s32.totalorder %s104, %s105
      %p116 = scmp.eq.s32.totalorder %s23, 0
      %p117 = por %p115, %p116
      %p118 = scmp.ne.s32.totalorder %s104, %s105
      %p119 = scmp.eq.s32.totalorder %s24, 1
      %p120 = por %p118, %p119
      %p122 = scmp.ne.s32.totalorder %s105, %s121
      %p123 = scmp.eq.s32.totalorder %s24, 0
      %p124 = por %p122, %p123
      %s125 = ssub.s32 %s18, %s25
      %p126 = scmp.eq.s32.totalorder %s125, 0
      %s128 = sadd.s32 %s127, 1
      %s129 = scalar_select %p126, %s127, %s128
      %p132 = pneg %p126
      %p133 = scmp.eq.s32.totalorder %s18, 1
      %p134 = por %p132, %p133
      %p135 = scmp.ne.s32.totalorder %s127, %s130
      %p136 = scmp.eq.s32.totalorder %s18, 0
      %p137 = por %p135, %p136
      %p138 = scmp.ne.s32.totalorder %s127, %s130
      %p139 = scmp.eq.s32.totalorder %s23, 1
      %p140 = por %p138, %p139
      %p141 = scmp.ne.s32.totalorder %s130, %s131
      %p142 = scmp.eq.s32.totalorder %s23, 0
      %p143 = por %p141, %p142
      %p144 = scmp.ne.s32.totalorder %s130, %s131
      %p145 = scmp.eq.s32.totalorder %s24, 1
      %p146 = por %p144, %p145
      %p148 = scmp.ne.s32.totalorder %s131, %s147
      %p149 = scmp.eq.s32.totalorder %s24, 0
      %p150 = por %p148, %p149
      %p151 = scmp.le.s32.totalorder 1, %s18
      %p152 = scmp.lt.s32.totalorder %s18, 3
      %p153 = pnand %p151, %p152
      %p154 = pneg %p153
      // Predicated region
      $region9: #{tpu_custom_call.1} parent=5 // pred_check
        _
      $region10: #{tpu_custom_call.1} parent=5 // pred_check_branch
        %156 = sbr.rel (%p153) target = $region12
      $region11: #{tpu_custom_call.1} parent=5 // pred_region
        %s157 = ssub.s32 %s18, 1
        // Predicated region
        $region13: #{tpu_custom_call.1} parent=11 // pred_check
          %p158 = pneg %p65
        $region14: #{tpu_custom_call.1} parent=11 // pred_check_branch
          %160 = sbr.rel (%p158) target = $region16
        $region15: #{tpu_custom_call.1} parent=11 // pred_region
          %162 = vsyncadd [#allocation6], 0
          %s163 = sshll.u32 %s1, 4
          %s164 = int_to_ptr.hbm [resolvable:$true] %s163
          %s165 = sshll.u32 [#allocation5], 4
          %s166 = int_to_ptr.vmem [resolvable:$true] %s165
          %171 = dma.hbm_to_vmem [thread:$0]  %s164, 128, %s166, [#allocation6], 64, 64, 4
        $region16: #{tpu_custom_call.1} parent=11 // pred_fallthru
          _
      $region12: #{tpu_custom_call.1} parent=5 // pred_fallthru
        _
      %p172 = scmp.lt.s32.totalorder %s18, 2
      // Predicated region
      $region17: #{tpu_custom_call.1} parent=5 // pred_check
        %p173 = pneg %p172
      $region18: #{tpu_custom_call.1} parent=5 // pred_check_branch
        %175 = sbr.rel (%p173) target = $region20
      $region19: #{tpu_custom_call.1} parent=5 // pred_region
        // Predicated region
        $region21: #{tpu_custom_call.1} parent=19 // pred_check
          %p176 = pneg %p38
        $region22: #{tpu_custom_call.1} parent=19 // pred_check_branch
          %178 = sbr.rel (%p176) target = $region24
        $region23: #{tpu_custom_call.1} parent=19 // pred_region
          %s179 = sand.u32 %s28, 1
          %s180 = scalar_lea.sflag [#allocation3], %s179
          %s181 = sand.u32 %s28, 1
          %s182 = smul.addr %s181, 112
          %s183 = scalar_lea.vmem [#allocation2], %s182
          %s184 = smul.u32 2, %s18
          %186 = vsyncadd %s180, 0
          %s187 = smul.addr %s184, 4
          %s188 = scalar_lea.hbm %s0, %s187
          %s189 = sshll.u32 %s188, 4
          %s190 = int_to_ptr.hbm [resolvable:$true] %s189
          %s191 = sshll.u32 %s183, 4
          %s192 = int_to_ptr.vmem [resolvable:$true] %s191
          %197 = dma.hbm_to_vmem [thread:$0]  %s190, 1792, %s192, %s180, 256, 128, 8
        $region24: #{tpu_custom_call.1} parent=19 // pred_fallthru
          _
      $region20: #{tpu_custom_call.1} parent=5 // pred_fallthru
        _
      %p198 = scmp.le.s32.totalorder 1, %s18
      %p199 = scmp.lt.s32.totalorder %s18, 3
      %p200 = pnand %p198, %p199
      %p201 = pneg %p200
      // Predicated region
      $region25: #{tpu_custom_call.1} parent=5 // pred_check
        _
      $region26: #{tpu_custom_call.1} parent=5 // pred_check_branch
        %203 = sbr.rel (%p200) target = $region28
      $region27: #{tpu_custom_call.1} parent=5 // pred_region
        %s204 = ssub.s32 %s18, 1
        %s205 = sand.u32 %s31, 1
        %s206 = scalar_lea.sflag [#allocation3], %s205
        %s207 = sand.u32 %s31, 1
        %s208 = smul.addr %s207, 112
        %s209 = scalar_lea.vmem [#allocation2], %s208
        // Predicated region
        $region29: #{tpu_custom_call.1} parent=27 // pred_check
          %p210 = pneg %p44
        $region30: #{tpu_custom_call.1} parent=27 // pred_check_branch
          %212 = sbr.rel (%p210) target = $region32
        $region31: #{tpu_custom_call.1} parent=27 // pred_region
          %214 = dma.done %s206, 1792
        $region32: #{tpu_custom_call.1} parent=27 // pred_fallthru
          _
        // Predicated region
        $region33: #{tpu_custom_call.1} parent=27 // pred_check
          %p215 = pneg %p65
        $region34: #{tpu_custom_call.1} parent=27 // pred_check_branch
          %217 = sbr.rel (%p215) target = $region36
        $region35: #{tpu_custom_call.1} parent=27 // pred_region
          %219 = dma.done [#allocation6], 128
        $region36: #{tpu_custom_call.1} parent=27 // pred_fallthru
          _
        %s220 = sand.u32 %s31, 1
        %s221 = scalar_lea.sflag [#allocation3], %s220
        %s222 = sand.u32 %s31, 1
        %s223 = smul.addr %s222, 112
        %s224 = scalar_lea.vmem [#allocation2], %s223
        %p225 = pneg %p44
        %p226 = pneg %p41
        %p227 = pneg %p65
        %p228 = pneg %p62
        %p229 = pneg %p91
        %p230 = pneg %p88
        %s231 = sand.u32 %s78, 1
        %s232 = scalar_lea.sflag [#allocation4], %s231
        %s233 = sand.u32 %s78, 1
        %s234 = smul.addr %s233, 16
        %s235 = scalar_lea.vmem [#allocation7], %s234
        %p236 = pneg %p117
        %p237 = pneg %p114
        %p238 = scmp.lt.s32.totalorder %s23, 1
        %s239 = scalar_select %p238, %s23, 1
        %s240 = smul.addr %s239, 2
        %s241 = smul.addr %s240, 8
        %s242 = scalar_lea.vmem %s3, %s241
        %p243 = pneg %p143
        %p244 = pneg %p140
        %p245 = scmp.lt.s32.totalorder %s23, 1
        %s246 = scalar_select %p245, %s23, 1
        %s247 = smul.addr %s246, 2
        %s248 = smul.addr %s247, 8
        %s249 = scalar_lea.vmem %s4, %s248
        %s250 = smul.u32 2, %s23
        %s251 = smul.u32 2, %s23
        %p252 = scmp.lt.s32.totalorder %s23, 1
        %s253 = scalar_select %p252, %s23, 1
        %s254 = smul.addr %s253, 2
        %s255 = smul.addr %s254, 8
        %s256 = scalar_lea.vmem %s3, %s255
        %p257 = scmp.lt.s32.totalorder %s23, 1
        %s258 = scalar_select %p257, %s23, 1
        %s259 = smul.addr %s258, 2
        %s260 = smul.addr %s259, 8
        %s261 = scalar_lea.vmem %s4, %s260
        %v263 = vld [vmem:[#allocation5] sm:$0xf]
        %v264 = vld [vmem:[#allocation5 + $0x4] sm:$0xf]
        %v265 = vld [vmem:[%s209] sm:$0xff]
        %v266 = vld [vmem:[%s209 + $0x8] sm:$0xff]
        %v267 = vld [vmem:[%s209 + $0x10] sm:$0xff]
        %v268 = vld [vmem:[%s209 + $0x18] sm:$0xff]
        %v269 = vld [vmem:[%s209 + $0x20] sm:$0xff]
        %v270 = vld [vmem:[%s209 + $0x28] sm:$0xff]
        %v271 = vld [vmem:[%s209 + $0x30] sm:$0xff]
        %v272 = vld [vmem:[%s209 + $0x38] sm:$0xff]
        %v273 = vld [vmem:[%s209 + $0x40] sm:$0xff]
        %v274 = vld [vmem:[%s209 + $0x48] sm:$0xff]
        %v275 = vld [vmem:[%s209 + $0x50] sm:$0xff]
        %v276 = vld [vmem:[%s209 + $0x58] sm:$0xff]
        %v277 = vld [vmem:[%s209 + $0x60] sm:$0xff]
        %v278 = vld [vmem:[%s209 + $0x68] sm:$0xff]
        %v281 = vunpack.c.l.b16 %v263
        %v282 = vunpack.c.l.b16 %v264
        %v283 = vpack.c.b16 %v282, %v281
        %v298 = vunpack.c.l.b16 %v265
        %v299 = vunpack.c.h.b16 %v265
        %v300 = vunpack.c.l.b16 %v266
        %v301 = vunpack.c.h.b16 %v266
        %v302 = vunpack.c.l.b16 %v267
        %v303 = vunpack.c.h.b16 %v267
        %v304 = vunpack.c.l.b16 %v268
        %v305 = vunpack.c.h.b16 %v268
        %v306 = vunpack.c.l.b16 %v269
        %v307 = vunpack.c.h.b16 %v269
        %v308 = vunpack.c.l.b16 %v270
        %v309 = vunpack.c.h.b16 %v270
        %v310 = vunpack.c.l.b16 %v271
        %v311 = vunpack.c.h.b16 %v271
        %v312 = vunpack.c.l.b16 %v272
        %v313 = vunpack.c.h.b16 %v272
        %v314 = vunpack.c.l.b16 %v273
        %v315 = vunpack.c.h.b16 %v273
        %v316 = vunpack.c.l.b16 %v274
        %v317 = vunpack.c.h.b16 %v274
        %v318 = vunpack.c.l.b16 %v275
        %v319 = vunpack.c.h.b16 %v275
        %v320 = vunpack.c.l.b16 %v276
        %v321 = vunpack.c.h.b16 %v276
        %v322 = vunpack.c.l.b16 %v277
        %v323 = vunpack.c.h.b16 %v277
        %v324 = vunpack.c.l.b16 %v278
        %v325 = vunpack.c.h.b16 %v278
        %v326 = vpack.c.b16 %v300, %v298
        %v327 = vpack.c.b16 %v301, %v299
        %v328 = vpack.c.b16 %v304, %v302
        %v329 = vpack.c.b16 %v305, %v303
        %v330 = vpack.c.b16 %v308, %v306
        %v331 = vpack.c.b16 %v309, %v307
        %v332 = vpack.c.b16 %v312, %v310
        %v333 = vpack.c.b16 %v313, %v311
        %v334 = vpack.c.b16 %v316, %v314
        %v335 = vpack.c.b16 %v317, %v315
        %v336 = vpack.c.b16 %v320, %v318
        %v337 = vpack.c.b16 %v321, %v319
        %v338 = vpack.c.b16 %v324, %v322
        %v339 = vpack.c.b16 %v325, %v323
        %vm354 = vcmask 916480
        %v356 = vsel %vm354, %v283, 0
        %358 = vmatpush.bf16.msra.mxu0 0
        %359 = vmatpush.bf16.msra.mxu0 %v338
        %360 = vmatpush.bf16.msra.mxu0 %v336
        %361 = vmatpush.bf16.msra.mxu0 %v334
        %362 = vmatpush.bf16.msra.mxu0 %v332
        %363 = vmatpush.bf16.msra.mxu0 %v330
        %364 = vmatpush.bf16.msra.mxu0 %v328
        %365 = vmatpush.bf16.msra.mxu0 %v326
        %366 = vmatmul.bf16.gmra.mxu0 %v356
        %v367 = vpop.f32.mrf.mxu0
        %v368 = vadd.f32 0.0, %v367
        %v369 = vpop.f32.mrf.mxu0
        %v370 = vadd.f32 0.0, %v369
        %371 = vdwg.mxu0
        %372 = vmatpush.bf16.msra.mxu0 0
        %373 = vmatpush.bf16.msra.mxu0 %v339
        %374 = vmatpush.bf16.msra.mxu0 %v337
        %375 = vmatpush.bf16.msra.mxu0 %v335
        %376 = vmatpush.bf16.msra.mxu0 %v333
        %377 = vmatpush.bf16.msra.mxu0 %v331
        %378 = vmatpush.bf16.msra.mxu0 %v329
        %379 = vmatpush.bf16.msra.mxu0 %v327
        %380 = vmatmul.bf16.gmra.mxu0 %v356
        %v381 = vpop.f32.mrf.mxu0
        %v382 = vadd.f32 0.0, %v381
        %v383 = vpop.f32.mrf.mxu0
        %v384 = vadd.f32 0.0, %v383
        %385 = vdwg.mxu0
        %v386 = vpack.c.bf16 %v382, %v368
        %v387 = vpack.c.bf16 %v384, %v370
        %388 = vst [vmem:[%s235] sm:$0xff] %v386
        %389 = vst [vmem:[%s235 + $0x8] sm:$0xff] %v387
        %v390 = vadd.f32 %v368, %v382
        %391 = vadd.xlane.f32.xlu0 %v390
        %v392 = vpop.xlane.xlu0 %391
        %v393 = vadd.f32 %v370, %v384
        %394 = vadd.xlane.f32.xlu0 %v393
        %v395 = vpop.xlane.xlu0 %394
        %vm396 = vcmask 7168
        %397 = vst.msk [vmem:[%s256] sm:$0xff] %vm396, %v392
        %398 = vst.msk [vmem:[%s256 + $0x8] sm:$0xff] %vm396, %v395
        %v399 = vmul.f32 %v368, %v368
        %v400 = vmul.f32 %v382, %v382
        %v401 = vmul.f32 %v370, %v370
        %v402 = vmul.f32 %v384, %v384
        %v403 = vadd.f32 %v399, %v400
        %404 = vadd.xlane.f32.xlu0 %v403
        %v405 = vpop.xlane.xlu0 %404
        %v406 = vadd.f32 %v401, %v402
        %407 = vadd.xlane.f32.xlu0 %v406
        %v408 = vpop.xlane.xlu0 %407
        %409 = vst.msk [vmem:[%s261] sm:$0xff] %vm396, %v405
        %410 = vst.msk [vmem:[%s261 + $0x8] sm:$0xff] %vm396, %v408
        %s411 = sand.u32 %s78, 1
        %s412 = scalar_lea.sflag [#allocation4], %s411
        %s413 = sand.u32 %s78, 1
        %s414 = smul.addr %s413, 16
        %s415 = scalar_lea.vmem [#allocation7], %s414
        %p416 = scmp.lt.s32.totalorder %s23, 1
        %s417 = scalar_select %p416, %s23, 1
        %s418 = smul.addr %s417, 2
        %s419 = smul.addr %s418, 8
        %s420 = scalar_lea.vmem %s3, %s419
        %p421 = scmp.lt.s32.totalorder %s23, 1
        %s422 = scalar_select %p421, %s23, 1
        %s423 = smul.addr %s422, 2
        %s424 = smul.addr %s423, 8
        %s425 = scalar_lea.vmem %s4, %s424
        // Predicated region
        $region37: #{tpu_custom_call.1} parent=27 // pred_check
          %p426 = pneg %p88
        $region38: #{tpu_custom_call.1} parent=27 // pred_check_branch
          %428 = sbr.rel (%p426) target = $region40
        $region39: #{tpu_custom_call.1} parent=27 // pred_region
          %s429 = smul.u32 2, %s23
          %431 = vsyncadd %s412, 0
          %s432 = smul.addr %s429, 4
          %s433 = scalar_lea.hbm %s2, %s432
          %s434 = sshll.u32 %s415, 4
          %s435 = int_to_ptr.vmem [resolvable:$true] %s434
          %s436 = sshll.u32 %s433, 4
          %s437 = int_to_ptr.hbm [resolvable:$true] %s436
          %442 = dma.vmem_to_hbm [thread:$0]  %s435, 256, %s437, %s412, 128, 256, 8
        $region40: #{tpu_custom_call.1} parent=27 // pred_fallthru
          _
        // Predicated region
        $region41: #{tpu_custom_call.1} parent=27 // pred_check
          %p443 = pneg %p114
        $region42: #{tpu_custom_call.1} parent=27 // pred_check_branch
          %445 = sbr.rel (%p443) target = $region44
        $region43: #{tpu_custom_call.1} parent=27 // pred_region
          _
        $region44: #{tpu_custom_call.1} parent=27 // pred_fallthru
          _
        // Predicated region
        $region45: #{tpu_custom_call.1} parent=27 // pred_check
          %p446 = pneg %p140
        $region46: #{tpu_custom_call.1} parent=27 // pred_check_branch
          %448 = sbr.rel (%p446) target = $region48
        $region47: #{tpu_custom_call.1} parent=27 // pred_region
          _
        $region48: #{tpu_custom_call.1} parent=27 // pred_fallthru
          _
      $region28: #{tpu_custom_call.1} parent=5 // pred_fallthru
        _
      %p449 = scmp.le.s32.totalorder 2, %s18
      // Predicated region
      $region49: #{tpu_custom_call.1} parent=5 // pred_check
        %p450 = pneg %p449
      $region50: #{tpu_custom_call.1} parent=5 // pred_check_branch
        %452 = sbr.rel (%p450) target = $region52
      $region51: #{tpu_custom_call.1} parent=5 // pred_region
        %s453 = ssub.s32 %s18, 2
        // Predicated region
        $region53: #{tpu_custom_call.1} parent=51 // pred_check
          %p454 = pneg %p94
        $region54: #{tpu_custom_call.1} parent=51 // pred_check_branch
          %456 = sbr.rel (%p454) target = $region56
        $region55: #{tpu_custom_call.1} parent=51 // pred_region
          %s457 = sand.u32 %s79, 1
          %s458 = scalar_lea.sflag [#allocation4], %s457
          %s459 = sand.u32 %s79, 1
          %s460 = smul.addr %s459, 16
          %s461 = scalar_lea.vmem [#allocation7], %s460
          %463 = dma.done %s458, 256
        $region56: #{tpu_custom_call.1} parent=51 // pred_fallthru
          _
        // Predicated region
        $region57: #{tpu_custom_call.1} parent=51 // pred_check
          %p464 = pneg %p120
        $region58: #{tpu_custom_call.1} parent=51 // pred_check_branch
          %466 = sbr.rel (%p464) target = $region60
        $region59: #{tpu_custom_call.1} parent=51 // pred_region
          %p467 = scmp.lt.s32.totalorder %s24, 1
          %s468 = scalar_select %p467, %s24, 1
          %s469 = smul.addr %s468, 2
          %s470 = smul.addr %s469, 8
          %s471 = scalar_lea.vmem %s3, %s470
        $region60: #{tpu_custom_call.1} parent=51 // pred_fallthru
          _
        // Predicated region
        $region61: #{tpu_custom_call.1} parent=51 // pred_check
          %p472 = pneg %p146
        $region62: #{tpu_custom_call.1} parent=51 // pred_check_branch
          %474 = sbr.rel (%p472) target = $region64
        $region63: #{tpu_custom_call.1} parent=51 // pred_region
          %p475 = scmp.lt.s32.totalorder %s24, 1
          %s476 = scalar_select %p475, %s24, 1
          %s477 = smul.addr %s476, 2
          %s478 = smul.addr %s477, 8
          %s479 = scalar_lea.vmem %s4, %s478
        $region64: #{tpu_custom_call.1} parent=51 // pred_fallthru
          _
      $region52: #{tpu_custom_call.1} parent=5 // pred_fallthru
        _
    $region6: #{tpu_custom_call.1} parent=1 // loop_footer
      %s22 = sadd.s32 1, %s18
    $region7: #{tpu_custom_call.1} parent=1 // loop_footer_branch
      %17 = sbr.rel target = $region3
    $region8: #{tpu_custom_call.1} parent=1 // loop_exit
      _
    %480 = vsyncpa [#allocation3], 1
    %s481 = scalar_lea.sflag [#allocation3], 1
    %482 = vsyncpa %s481, 1
    %483 = vsyncpa [#allocation6], 1
    %484 = vsyncpa [#allocation4], 1
    %s485 = scalar_lea.sflag [#allocation4], 1
    %486 = vsyncpa %s485, 1

</llo_original>
